<compile_context>
chip_gen: v7x
topology: tpu7x:2x2x1
jax: 0.10.0
libtpu: 0.0.40
codegen_flags: <defaults>
</compile_context>

<pallas_src>
import jax
import jax.numpy as jnp
from jax.experimental import pallas as pl
from jax.experimental.pallas import tpu as pltpu

_HIDDEN = 20  # fixed by the module definition


def _round_up(n, m):
    return ((n + m - 1) // m) * m


def _mlp_kernel(x_ref, w1_ref, b1_ref, w2_ref, b2_ref,
                w3_ref, b3_ref, w4_ref, b4_ref, o_ref):
    # Fused 4-layer MLP: (Linear -> ReLU) x3 -> Linear, all on the current
    # batch tile resident in VMEM. Accumulation is always f32; activations are
    # cast back to the weight dtype only when the bf16 path is enabled.
    wdt = w2_ref.dtype
    x = x_ref[...]
    h = jnp.dot(x, w1_ref[...], preferred_element_type=jnp.float32) + b1_ref[...]
    h = jnp.maximum(h, 0.0)
    h = jnp.dot(h.astype(wdt), w2_ref[...],
                preferred_element_type=jnp.float32) + b2_ref[...]
    h = jnp.maximum(h, 0.0)
    h = jnp.dot(h.astype(wdt), w3_ref[...],
                preferred_element_type=jnp.float32) + b3_ref[...]
    h = jnp.maximum(h, 0.0)
    h = jnp.dot(h.astype(wdt), w4_ref[...],
                preferred_element_type=jnp.float32) + b4_ref[...]
    o_ref[...] = h.astype(o_ref.dtype)


def _choose_batch_tile(B, F, T,
                       vmem_budget_bytes=24 * 1024 * 1024,
                       max_tile=1024):
    """Pick a batch tile sized against the lane-padded VMEM footprint.

    Every activation row pads its last dim to 128 lanes (H=20 -> 128,
    T -> >=128), so the per-row cost is much larger than the raw shapes
    suggest. Budget: 2x double-buffered x tile + 2x double-buffered out tile
    + ~4 lane-padded f32 intermediates. 24 MiB keeps comfortable headroom
    under v7x's 32 MiB scoped default / 64 MiB physical VMEM.
    """
    F_pad = _round_up(max(F, 1), 128)
    T_pad = _round_up(max(T, 1), 128)
    H_pad = _round_up(_HIDDEN, 128)          # 20 -> 128 lanes
    bytes_per_row = 4 * (2 * F_pad + 2 * T_pad + 4 * H_pad)
    cap = max(8, (vmem_budget_bytes // bytes_per_row) // 8 * 8)
    tile = min(max_tile, cap)

    B_pad = _round_up(B, 8)
    if B_pad <= tile:
        # Whole batch fits in one tile. Prefer two tiles (when B allows) so the
        # "parallel" grid axis can use both TensorCores on v7x.
        if B_pad >= 16:
            tile = _round_up((B_pad + 1) // 2, 8)
        else:
            tile = B_pad
    return tile


def fc_three_deep_twenty_wide(x, params, *, batch_tile=None, use_bf16=False):
    """x: [B, len_feat] float32. params: w1..w4 stored as (in, out), b1..b4 as (1, out)."""
    B, F = x.shape
    w1, b1 = params["w1"], params["b1"]
    w2, b2 = params["w2"], params["b2"]
    w3, b3 = params["w3"], params["b3"]
    w4, b4 = params["w4"], params["b4"]
    H = w1.shape[1]          # 20
    T = w4.shape[1]          # len_target

    if batch_tile is None:
        batch_tile = _choose_batch_tile(B, F, T)
    batch_tile = max(8, _round_up(int(batch_tile), 8))

    num_tiles = pl.cdiv(B, batch_tile)
    B_pad = num_tiles * batch_tile

    x_in = x
    if use_bf16:
        # Halves the HBM read of x (the true roofline at large B). Biases and
        # the ReLU/accumulation stay f32.
        x_in = x_in.astype(jnp.bfloat16)
        w1 = w1.astype(jnp.bfloat16)
        w2 = w2.astype(jnp.bfloat16)
        w3 = w3.astype(jnp.bfloat16)
        w4 = w4.astype(jnp.bfloat16)
    if B_pad != B:
        x_in = jnp.pad(x_in, ((0, B_pad - B), (0, 0)))

    grid = (num_tiles,)

    def xmap(i):             # batch-tiled operands
        return (i, 0)

    def rep(i):              # weights/biases replicated across batch tiles
        return (0, 0)

    # Advisory cost: tiny compute, HBM-read dominated.
    itemsize = jnp.dtype(x_in.dtype).itemsize
    w_itemsize = jnp.dtype(w1.dtype).itemsize
    flops = 2 * B_pad * (F * H + 2 * H * H + H * T)
    weight_bytes = (w_itemsize * (F * H + 2 * H * H + H * T)
                    + 4 * (3 * H + T))
    bytes_accessed = itemsize * B_pad * F + 4 * B_pad * T + weight_bytes
    cost = pl.CostEstimate(flops=int(flops), transcendentals=0,
                           bytes_accessed=int(bytes_accessed))

    out = pl.pallas_call(
        _mlp_kernel,
        out_shape=jax.ShapeDtypeStruct((B_pad, T), jnp.float32),
        grid_spec=pltpu.PrefetchScalarGridSpec(
            num_scalar_prefetch=0,
            grid=grid,
            in_specs=[
                pl.BlockSpec((batch_tile, F), xmap),   # x tile
                pl.BlockSpec((F, H), rep),             # w1
                pl.BlockSpec((1, H), rep),             # b1
                pl.BlockSpec((H, H), rep),             # w2
                pl.BlockSpec((1, H), rep),             # b2
                pl.BlockSpec((H, H), rep),             # w3
                pl.BlockSpec((1, H), rep),             # b3
                pl.BlockSpec((H, T), rep),             # w4
                pl.BlockSpec((1, T), rep),             # b4
            ],
            out_specs=pl.BlockSpec((batch_tile, T), xmap),
        ),
        compiler_params=pltpu.CompilerParams(
            dimension_semantics=("parallel",),
            vmem_limit_bytes=32 * 1024 * 1024),
        cost_estimate=cost,
    )(x_in, w1, b1, w2, b2, w3, b3, w4, b4)

    if B_pad != B:
        out = out[:B]
    return out


def init_params(key, len_feat, len_target, hidden=_HIDDEN):
    """Deterministic init mimicking torch.nn.Linear default:
    U(-1/sqrt(fan_in), 1/sqrt(fan_in)) for weight and bias."""
    params = {}
    dims = [(len_feat, hidden), (hidden, hidden), (hidden, hidden),
            (hidden, len_target)]
    for idx, (fan_in, fan_out) in enumerate(dims, start=1):
        key, kw, kb = jax.random.split(key, 3)
        bound = 1.0 / jnp.sqrt(jnp.float32(fan_in))
        # stored as (in, out) so kernel computes x @ W
        params[f"w{idx}"] = jax.random.uniform(
            kw, (fan_in, fan_out), jnp.float32, minval=-bound, maxval=bound)
        params[f"b{idx}"] = jax.random.uniform(
            kb, (1, fan_out), jnp.float32, minval=-bound, maxval=bound)
    return params


def reference_forward(x, p):
    h = jax.nn.relu(x @ p["w1"] + p["b1"])
    h = jax.nn.relu(h @ p["w2"] + p["b2"])
    h = jax.nn.relu(h @ p["w3"] + p["b3"])
    return h @ p["w4"] + p["b4"]


if __name__ == "__main__":
    key = jax.random.PRNGKey(0)
    len_feat, len_target = 32, 4
    kx1, kx2, kp = jax.random.split(key, 3)
    params = init_params(kp, len_feat, len_target)

    # Case 1: small batch, evenly tiled (auto tile -> 2 tiles of 8 rows).
    B1 = 16
    x1 = jax.random.normal(kx1, (B1, len_feat), jnp.float32)
    out1 = jax.block_until_ready(fc_three_deep_twenty_wide(x1, params))
    ref1 = reference_forward(x1, params)
    assert out1.shape == (B1, len_target)
    assert jnp.allclose(out1, ref1, atol=1e-5, rtol=1e-5)

    # Case 2: batch not divisible by the tile -> exercises the padded tail path.
    B2 = 13
    x2 = jax.random.normal(kx2, (B2, len_feat), jnp.float32)
    out2 = jax.block_until_ready(fc_three_deep_twenty_wide(x2, params))
    ref2 = reference_forward(x2, params)
    assert out2.shape == (B2, len_target)
    assert jnp.allclose(out2, ref2, atol=1e-5, rtol=1e-5)

    print("KERNEL_OK")
</pallas_src>

<mosaic_0001>
module attributes {stable_mosaic.version = 11 : i64} {
  func.func @_mlp_kernel(%arg0: i32, %arg1: memref<8x32xf32, #tpu.memory_space<vmem>>, %arg2: memref<32x20xf32, #tpu.memory_space<vmem>>, %arg3: memref<1x20xf32, #tpu.memory_space<vmem>>, %arg4: memref<20x20xf32, #tpu.memory_space<vmem>>, %arg5: memref<1x20xf32, #tpu.memory_space<vmem>>, %arg6: memref<20x20xf32, #tpu.memory_space<vmem>>, %arg7: memref<1x20xf32, #tpu.memory_space<vmem>>, %arg8: memref<20x4xf32, #tpu.memory_space<vmem>>, %arg9: memref<1x4xf32, #tpu.memory_space<vmem>>, %arg10: memref<8x4xf32, #tpu.memory_space<vmem>>) attributes {dimension_semantics = [#tpu.dimension_semantics<parallel>], iteration_bounds = array<i64: 2>, scalar_prefetch = 0 : i64, scratch_operands = 0 : i64, tpu.core_type = #tpu.core_type<tc>, window_params = [{transform_indices = @transform_0, window_bounds = array<i64: 8, 32>}, {pipeline_mode = #tpu.pipeline_mode<synchronous>, transform_indices = @transform_1, window_bounds = array<i64: 32, 20>}, {pipeline_mode = #tpu.pipeline_mode<synchronous>, transform_indices = @transform_2, window_bounds = array<i64: 1, 20>}, {pipeline_mode = #tpu.pipeline_mode<synchronous>, transform_indices = @transform_3, window_bounds = array<i64: 20, 20>}, {pipeline_mode = #tpu.pipeline_mode<synchronous>, transform_indices = @transform_4, window_bounds = array<i64: 1, 20>}, {pipeline_mode = #tpu.pipeline_mode<synchronous>, transform_indices = @transform_5, window_bounds = array<i64: 20, 20>}, {pipeline_mode = #tpu.pipeline_mode<synchronous>, transform_indices = @transform_6, window_bounds = array<i64: 1, 20>}, {pipeline_mode = #tpu.pipeline_mode<synchronous>, transform_indices = @transform_7, window_bounds = array<i64: 20, 4>}, {pipeline_mode = #tpu.pipeline_mode<synchronous>, transform_indices = @transform_8, window_bounds = array<i64: 1, 4>}, {transform_indices = @transform_9, window_bounds = array<i64: 8, 4>}]} {
    %c0 = arith.constant 0 : index
    %c0_0 = arith.constant 0 : index
    %0 = vector.load %arg1[%c0, %c0_0] : memref<8x32xf32, #tpu.memory_space<vmem>>, vector<8x32xf32>
    %c0_1 = arith.constant 0 : index
    %c0_2 = arith.constant 0 : index
    %1 = vector.load %arg2[%c0_1, %c0_2] : memref<32x20xf32, #tpu.memory_space<vmem>>, vector<32x20xf32>
    %cst = arith.constant dense<0.000000e+00> : vector<8x20xf32>
    %2 = tpu.matmul %0, %1, %cst {dimension_numbers = #tpu.dot_dimension_numbers<[1], [0], [0], [1], [0, 0, 1, 1], [], []>} : vector<8x32xf32>, vector<32x20xf32>, vector<8x20xf32> -> vector<8x20xf32>
    %c0_3 = arith.constant 0 : index
    %c0_4 = arith.constant 0 : index
    %3 = vector.load %arg3[%c0_3, %c0_4] : memref<1x20xf32, #tpu.memory_space<vmem>>, vector<1x20xf32>
    %4 = vector.broadcast %3 : vector<1x20xf32> to vector<8x20xf32>
    %5 = arith.addf %2, %4 : vector<8x20xf32>
    %cst_5 = arith.constant 0.000000e+00 : f32
    %6 = vector.broadcast %cst_5 : f32 to vector<8x20xf32>
    %7 = arith.maximumf %5, %6 : vector<8x20xf32>
    %c0_6 = arith.constant 0 : index
    %c0_7 = arith.constant 0 : index
    %8 = vector.load %arg4[%c0_6, %c0_7] : memref<20x20xf32, #tpu.memory_space<vmem>>, vector<20x20xf32>
    %cst_8 = arith.constant dense<0.000000e+00> : vector<8x20xf32>
    %9 = tpu.matmul %7, %8, %cst_8 {dimension_numbers = #tpu.dot_dimension_numbers<[1], [0], [0], [1], [0, 0, 1, 1], [], []>} : vector<8x20xf32>, vector<20x20xf32>, vector<8x20xf32> -> vector<8x20xf32>
    %c0_9 = arith.constant 0 : index
    %c0_10 = arith.constant 0 : index
    %10 = vector.load %arg5[%c0_9, %c0_10] : memref<1x20xf32, #tpu.memory_space<vmem>>, vector<1x20xf32>
    %11 = vector.broadcast %10 : vector<1x20xf32> to vector<8x20xf32>
    %12 = arith.addf %9, %11 : vector<8x20xf32>
    %cst_11 = arith.constant 0.000000e+00 : f32
    %13 = vector.broadcast %cst_11 : f32 to vector<8x20xf32>
    %14 = arith.maximumf %12, %13 : vector<8x20xf32>
    %c0_12 = arith.constant 0 : index
    %c0_13 = arith.constant 0 : index
    %15 = vector.load %arg6[%c0_12, %c0_13] : memref<20x20xf32, #tpu.memory_space<vmem>>, vector<20x20xf32>
    %cst_14 = arith.constant dense<0.000000e+00> : vector<8x20xf32>
    %16 = tpu.matmul %14, %15, %cst_14 {dimension_numbers = #tpu.dot_dimension_numbers<[1], [0], [0], [1], [0, 0, 1, 1], [], []>} : vector<8x20xf32>, vector<20x20xf32>, vector<8x20xf32> -> vector<8x20xf32>
    %c0_15 = arith.constant 0 : index
    %c0_16 = arith.constant 0 : index
    %17 = vector.load %arg7[%c0_15, %c0_16] : memref<1x20xf32, #tpu.memory_space<vmem>>, vector<1x20xf32>
    %18 = vector.broadcast %17 : vector<1x20xf32> to vector<8x20xf32>
    %19 = arith.addf %16, %18 : vector<8x20xf32>
    %cst_17 = arith.constant 0.000000e+00 : f32
    %20 = vector.broadcast %cst_17 : f32 to vector<8x20xf32>
    %21 = arith.maximumf %19, %20 : vector<8x20xf32>
    %c0_18 = arith.constant 0 : index
    %c0_19 = arith.constant 0 : index
    %22 = vector.load %arg8[%c0_18, %c0_19] : memref<20x4xf32, #tpu.memory_space<vmem>>, vector<20x4xf32>
    %cst_20 = arith.constant dense<0.000000e+00> : vector<8x4xf32>
    %23 = tpu.matmul %21, %22, %cst_20 {dimension_numbers = #tpu.dot_dimension_numbers<[1], [0], [0], [1], [0, 0, 1, 1], [], []>} : vector<8x20xf32>, vector<20x4xf32>, vector<8x4xf32> -> vector<8x4xf32>
    %c0_21 = arith.constant 0 : index
    %c0_22 = arith.constant 0 : index
    %24 = vector.load %arg9[%c0_21, %c0_22] : memref<1x4xf32, #tpu.memory_space<vmem>>, vector<1x4xf32>
    %25 = vector.broadcast %24 : vector<1x4xf32> to vector<8x4xf32>
    %26 = arith.addf %23, %25 : vector<8x4xf32>
    %c0_23 = arith.constant 0 : index
    %c0_24 = arith.constant 0 : index
    %27 = vector.load %arg10[%c0_23, %c0_24] : memref<8x4xf32, #tpu.memory_space<vmem>>, vector<8x4xf32>
    tpu.vector_store %arg10[%c0_23, %c0_24], %26 {strides = array<i32>} : memref<8x4xf32, #tpu.memory_space<vmem>>, vector<8x4xf32>,
    return
  }
  func.func @transform_0(%arg0: i32) -> (i32, i32) {
    %c0_i32 = arith.constant 0 : i32
    %c0_i32_0 = arith.constant 0 : i32
    return %arg0, %c0_i32 : i32, i32
  }
  func.func @transform_1(%arg0: i32) -> (i32, i32) {
    %c0_i32 = arith.constant 0 : i32
    %c0_i32_0 = arith.constant 0 : i32
    %c0_i32_1 = arith.constant 0 : i32
    return %c0_i32, %c0_i32_0 : i32, i32
  }
  func.func @transform_2(%arg0: i32) -> (i32, i32) {
    %c0_i32 = arith.constant 0 : i32
    %c0_i32_0 = arith.constant 0 : i32
    %c0_i32_1 = arith.constant 0 : i32
    return %c0_i32, %c0_i32_0 : i32, i32
  }
  func.func @transform_3(%arg0: i32) -> (i32, i32) {
    %c0_i32 = arith.constant 0 : i32
    %c0_i32_0 = arith.constant 0 : i32
    %c0_i32_1 = arith.constant 0 : i32
    return %c0_i32, %c0_i32_0 : i32, i32
  }
  func.func @transform_4(%arg0: i32) -> (i32, i32) {
    %c0_i32 = arith.constant 0 : i32
    %c0_i32_0 = arith.constant 0 : i32
    %c0_i32_1 = arith.constant 0 : i32
    return %c0_i32, %c0_i32_0 : i32, i32
  }
  func.func @transform_5(%arg0: i32) -> (i32, i32) {
    %c0_i32 = arith.constant 0 : i32
    %c0_i32_0 = arith.constant 0 : i32
    %c0_i32_1 = arith.constant 0 : i32
    return %c0_i32, %c0_i32_0 : i32, i32
  }
  func.func @transform_6(%arg0: i32) -> (i32, i32) {
    %c0_i32 = arith.constant 0 : i32
    %c0_i32_0 = arith.constant 0 : i32
    %c0_i32_1 = arith.constant 0 : i32
    return %c0_i32, %c0_i32_0 : i32, i32
  }
  func.func @transform_7(%arg0: i32) -> (i32, i32) {
    %c0_i32 = arith.constant 0 : i32
    %c0_i32_0 = arith.constant 0 : i32
    %c0_i32_1 = arith.constant 0 : i32
    return %c0_i32, %c0_i32_0 : i32, i32
  }
  func.func @transform_8(%arg0: i32) -> (i32, i32) {
    %c0_i32 = arith.constant 0 : i32
    %c0_i32_0 = arith.constant 0 : i32
    %c0_i32_1 = arith.constant 0 : i32
    return %c0_i32, %c0_i32_0 : i32, i32
  }
  func.func @transform_9(%arg0: i32) -> (i32, i32) {
    %c0_i32 = arith.constant 0 : i32
    %c0_i32_0 = arith.constant 0 : i32
    return %arg0, %c0_i32 : i32, i32
  }
}

</mosaic_0001>

<llo_original>
// kernel: tpu_custom_call.1
$region0: #{tpu_custom_call.1}
  #allocation0 [shape = 'u32[]', space=smem, size = 0x4, offset = 0x4, fixed_abs, tag = 'smem constant byte address 0x4 - core index']
  #allocation1 [shape = 'u32[144,128]{1,0:T(1,128)}', space=vmem, size = 0x12000, scoped, tag = 'internal scratch']
  %s0 = inlined_call_operand.hbm [shape: f32[16,32], index: 0, kind: input, shape index: {}]
  %s1 = inlined_call_operand.vmem [shape: f32[32,20], index: 1, kind: input, shape index: {}]
  %s2 = inlined_call_operand.vmem [shape: f32[1,20], index: 2, kind: input, shape index: {}]
  %s3 = inlined_call_operand.vmem [shape: f32[20,20], index: 3, kind: input, shape index: {}]
  %s4 = inlined_call_operand.vmem [shape: f32[1,20], index: 4, kind: input, shape index: {}]
  %s5 = inlined_call_operand.vmem [shape: f32[20,20], index: 5, kind: input, shape index: {}]
  %s6 = inlined_call_operand.vmem [shape: f32[1,20], index: 6, kind: input, shape index: {}]
  %s7 = inlined_call_operand.vmem [shape: f32[20,4], index: 7, kind: input, shape index: {}]
  %s8 = inlined_call_operand.vmem [shape: f32[1,4], index: 8, kind: input, shape index: {}]
  %s9 = inlined_call_operand.vmem [shape: f32[16,4], index: 9, kind: output, shape index: {}]
  %s10 = sld [smem:[#allocation0]]
  $region73: #{tpu_custom_call.1} parent=0
    _
  %s12 = ssub.s32 1, %s10
  %s13 = scalar_select 0, %s12, %s10
  $region1: #{tpu_custom_call.1} parent=0
    #allocation2 [shape = 'u8[8192]{0}', space=vmem, size = 0x2000, scoped, tag = 'input window, operand 0']
    #allocation3 [shape = 's32[2]{0}', space=sflag, size = 0x8, scoped, tag = 'scoped memory for tpu_custom_call.1']
    %14 = vsyncpa [#allocation3], 0
    %s15 = scalar_lea.sflag [#allocation3], 1
    %16 = vsyncpa %s15, 0
    loop: start=0, step=1, limit=4
    $region2: #{tpu_custom_call.1} parent=1 // loop_pre_header
      _
    $region3: #{tpu_custom_call.1} parent=1 // loop_header
      %s18 = sphi 0, %s22
      %p19 = scmp.ge.s32.totalorder %s18, 4
      %s28 = sphi 0, %s30
      %s31 = sphi 0, %s28
      %s32 = sphi 0, %s31
      %s48 = sphi 0, %s32
      %s52 = sphi 0, %s52
      %s54 = sphi 0, %s52
      %s55 = sphi 0, %s54
      %s69 = sphi 0, %s55
      %s73 = sphi 0, %s73
      %s75 = sphi 0, %s73
      %s76 = sphi 0, %s75
      %s90 = sphi 0, %s76
      %s94 = sphi 0, %s94
      %s96 = sphi 0, %s94
      %s97 = sphi 0, %s96
      %s111 = sphi 0, %s97
      %s115 = sphi 0, %s115
      %s117 = sphi 0, %s115
      %s118 = sphi 0, %s117
      %s132 = sphi 0, %s118
      %s136 = sphi 0, %s136
      %s138 = sphi 0, %s136
      %s139 = sphi 0, %s138
      %s153 = sphi 0, %s139
      %s157 = sphi 0, %s157
      %s159 = sphi 0, %s157
      %s160 = sphi 0, %s159
      %s174 = sphi 0, %s160
      %s178 = sphi 0, %s178
      %s180 = sphi 0, %s178
      %s181 = sphi 0, %s180
      %s195 = sphi 0, %s181
      %s199 = sphi 0, %s199
      %s201 = sphi 0, %s199
      %s202 = sphi 0, %s201
      %s216 = sphi 0, %s202
      %s222 = sphi 0, %s224
      %s225 = sphi 0, %s222
      %s226 = sphi 0, %s225
      %s242 = sphi 0, %s226
    $region4: #{tpu_custom_call.1} parent=1 // loop_header_branch
      %21 = sbr.rel (%p19) target = $region8
    $region5: #{tpu_custom_call.1} parent=1 // loop_body
      %s23 = ssub.s32 %s18, 1
      %s24 = ssub.s32 %s18, 2
      %s25 = sadd.s32 %s18, 1
      %s26 = ssub.s32 %s18, %s25
      %p27 = scmp.eq.s32.totalorder %s26, 0
      %s29 = sadd.s32 %s28, 1
      %s30 = scalar_select %p27, %s28, %s29
      %p33 = pneg %p27
      %p34 = scmp.eq.s32.totalorder %s18, 1
      %p35 = por %p33, %p34
      %p36 = scmp.ne.s32.totalorder %s28, %s31
      %p37 = scmp.eq.s32.totalorder %s18, 0
      %p38 = por %p36, %p37
      %p39 = scmp.ne.s32.totalorder %s28, %s31
      %p40 = scmp.eq.s32.totalorder %s23, 1
      %p41 = por %p39, %p40
      %p42 = scmp.ne.s32.totalorder %s31, %s32
      %p43 = scmp.eq.s32.totalorder %s23, 0
      %p44 = por %p42, %p43
      %p45 = scmp.ne.s32.totalorder %s31, %s32
      %p46 = scmp.eq.s32.totalorder %s24, 1
      %p47 = por %p45, %p46
      %p49 = scmp.ne.s32.totalorder %s32, %s48
      %p50 = scmp.eq.s32.totalorder %s24, 0
      %p51 = por %p49, %p50
      %s53 = sadd.s32 %s52, 1
      %p56 = scmp.eq.s32.totalorder %s18, 1
      %p57 = scmp.ne.s32.totalorder %s52, %s54
      %p58 = scmp.eq.s32.totalorder %s18, 0
      %p59 = por %p57, %p58
      %p60 = scmp.ne.s32.totalorder %s52, %s54
      %p61 = scmp.eq.s32.totalorder %s23, 1
      %p62 = por %p60, %p61
      %p63 = scmp.ne.s32.totalorder %s54, %s55
      %p64 = scmp.eq.s32.totalorder %s23, 0
      %p65 = por %p63, %p64
      %p66 = scmp.ne.s32.totalorder %s54, %s55
      %p67 = scmp.eq.s32.totalorder %s24, 1
      %p68 = por %p66, %p67
      %p70 = scmp.ne.s32.totalorder %s55, %s69
      %p71 = scmp.eq.s32.totalorder %s24, 0
      %p72 = por %p70, %p71
      %s74 = sadd.s32 %s73, 1
      %p77 = scmp.eq.s32.totalorder %s18, 1
      %p78 = scmp.ne.s32.totalorder %s73, %s75
      %p79 = scmp.eq.s32.totalorder %s18, 0
      %p80 = por %p78, %p79
      %p81 = scmp.ne.s32.totalorder %s73, %s75
      %p82 = scmp.eq.s32.totalorder %s23, 1
      %p83 = por %p81, %p82
      %p84 = scmp.ne.s32.totalorder %s75, %s76
      %p85 = scmp.eq.s32.totalorder %s23, 0
      %p86 = por %p84, %p85
      %p87 = scmp.ne.s32.totalorder %s75, %s76
      %p88 = scmp.eq.s32.totalorder %s24, 1
      %p89 = por %p87, %p88
      %p91 = scmp.ne.s32.totalorder %s76, %s90
      %p92 = scmp.eq.s32.totalorder %s24, 0
      %p93 = por %p91, %p92
      %s95 = sadd.s32 %s94, 1
      %p98 = scmp.eq.s32.totalorder %s18, 1
      %p99 = scmp.ne.s32.totalorder %s94, %s96
      %p100 = scmp.eq.s32.totalorder %s18, 0
      %p101 = por %p99, %p100
      %p102 = scmp.ne.s32.totalorder %s94, %s96
      %p103 = scmp.eq.s32.totalorder %s23, 1
      %p104 = por %p102, %p103
      %p105 = scmp.ne.s32.totalorder %s96, %s97
      %p106 = scmp.eq.s32.totalorder %s23, 0
      %p107 = por %p105, %p106
      %p108 = scmp.ne.s32.totalorder %s96, %s97
      %p109 = scmp.eq.s32.totalorder %s24, 1
      %p110 = por %p108, %p109
      %p112 = scmp.ne.s32.totalorder %s97, %s111
      %p113 = scmp.eq.s32.totalorder %s24, 0
      %p114 = por %p112, %p113
      %s116 = sadd.s32 %s115, 1
      %p119 = scmp.eq.s32.totalorder %s18, 1
      %p120 = scmp.ne.s32.totalorder %s115, %s117
      %p121 = scmp.eq.s32.totalorder %s18, 0
      %p122 = por %p120, %p121
      %p123 = scmp.ne.s32.totalorder %s115, %s117
      %p124 = scmp.eq.s32.totalorder %s23, 1
      %p125 = por %p123, %p124
      %p126 = scmp.ne.s32.totalorder %s117, %s118
      %p127 = scmp.eq.s32.totalorder %s23, 0
      %p128 = por %p126, %p127
      %p129 = scmp.ne.s32.totalorder %s117, %s118
      %p130 = scmp.eq.s32.totalorder %s24, 1
      %p131 = por %p129, %p130
      %p133 = scmp.ne.s32.totalorder %s118, %s132
      %p134 = scmp.eq.s32.totalorder %s24, 0
      %p135 = por %p133, %p134
      %s137 = sadd.s32 %s136, 1
      %p140 = scmp.eq.s32.totalorder %s18, 1
      %p141 = scmp.ne.s32.totalorder %s136, %s138
      %p142 = scmp.eq.s32.totalorder %s18, 0
      %p143 = por %p141, %p142
      %p144 = scmp.ne.s32.totalorder %s136, %s138
      %p145 = scmp.eq.s32.totalorder %s23, 1
      %p146 = por %p144, %p145
      %p147 = scmp.ne.s32.totalorder %s138, %s139
      %p148 = scmp.eq.s32.totalorder %s23, 0
      %p149 = por %p147, %p148
      %p150 = scmp.ne.s32.totalorder %s138, %s139
      %p151 = scmp.eq.s32.totalorder %s24, 1
      %p152 = por %p150, %p151
      %p154 = scmp.ne.s32.totalorder %s139, %s153
      %p155 = scmp.eq.s32.totalorder %s24, 0
      %p156 = por %p154, %p155
      %s158 = sadd.s32 %s157, 1
      %p161 = scmp.eq.s32.totalorder %s18, 1
      %p162 = scmp.ne.s32.totalorder %s157, %s159
      %p163 = scmp.eq.s32.totalorder %s18, 0
      %p164 = por %p162, %p163
      %p165 = scmp.ne.s32.totalorder %s157, %s159
      %p166 = scmp.eq.s32.totalorder %s23, 1
      %p167 = por %p165, %p166
      %p168 = scmp.ne.s32.totalorder %s159, %s160
      %p169 = scmp.eq.s32.totalorder %s23, 0
      %p170 = por %p168, %p169
      %p171 = scmp.ne.s32.totalorder %s159, %s160
      %p172 = scmp.eq.s32.totalorder %s24, 1
      %p173 = por %p171, %p172
      %p175 = scmp.ne.s32.totalorder %s160, %s174
      %p176 = scmp.eq.s32.totalorder %s24, 0
      %p177 = por %p175, %p176
      %s179 = sadd.s32 %s178, 1
      %p182 = scmp.eq.s32.totalorder %s18, 1
      %p183 = scmp.ne.s32.totalorder %s178, %s180
      %p184 = scmp.eq.s32.totalorder %s18, 0
      %p185 = por %p183, %p184
      %p186 = scmp.ne.s32.totalorder %s178, %s180
      %p187 = scmp.eq.s32.totalorder %s23, 1
      %p188 = por %p186, %p187
      %p189 = scmp.ne.s32.totalorder %s180, %s181
      %p190 = scmp.eq.s32.totalorder %s23, 0
      %p191 = por %p189, %p190
      %p192 = scmp.ne.s32.totalorder %s180, %s181
      %p193 = scmp.eq.s32.totalorder %s24, 1
      %p194 = por %p192, %p193
      %p196 = scmp.ne.s32.totalorder %s181, %s195
      %p197 = scmp.eq.s32.totalorder %s24, 0
      %p198 = por %p196, %p197
      %s200 = sadd.s32 %s199, 1
      %p203 = scmp.eq.s32.totalorder %s18, 1
      %p204 = scmp.ne.s32.totalorder %s199, %s201
      %p205 = scmp.eq.s32.totalorder %s18, 0
      %p206 = por %p204, %p205
      %p207 = scmp.ne.s32.totalorder %s199, %s201
      %p208 = scmp.eq.s32.totalorder %s23, 1
      %p209 = por %p207, %p208
      %p210 = scmp.ne.s32.totalorder %s201, %s202
      %p211 = scmp.eq.s32.totalorder %s23, 0
      %p212 = por %p210, %p211
      %p213 = scmp.ne.s32.totalorder %s201, %s202
      %p214 = scmp.eq.s32.totalorder %s24, 1
      %p215 = por %p213, %p214
      %p217 = scmp.ne.s32.totalorder %s202, %s216
      %p218 = scmp.eq.s32.totalorder %s24, 0
      %p219 = por %p217, %p218
      %s220 = ssub.s32 %s18, %s25
      %p221 = scmp.eq.s32.totalorder %s220, 0
      %s223 = sadd.s32 %s222, 1
      %s224 = scalar_select %p221, %s222, %s223
      %p227 = pneg %p221
      %p228 = scmp.eq.s32.totalorder %s18, 1
      %p229 = por %p227, %p228
      %p230 = scmp.ne.s32.totalorder %s222, %s225
      %p231 = scmp.eq.s32.totalorder %s18, 0
      %p232 = por %p230, %p231
      %p233 = scmp.ne.s32.totalorder %s222, %s225
      %p234 = scmp.eq.s32.totalorder %s23, 1
      %p235 = por %p233, %p234
      %p236 = scmp.ne.s32.totalorder %s225, %s226
      %p237 = scmp.eq.s32.totalorder %s23, 0
      %p238 = por %p236, %p237
      %p239 = scmp.ne.s32.totalorder %s225, %s226
      %p240 = scmp.eq.s32.totalorder %s24, 1
      %p241 = por %p239, %p240
      %p243 = scmp.ne.s32.totalorder %s226, %s242
      %p244 = scmp.eq.s32.totalorder %s24, 0
      %p245 = por %p243, %p244
      %p246 = scmp.le.s32.totalorder 1, %s18
      %p247 = scmp.lt.s32.totalorder %s18, 3
      %p248 = pnand %p246, %p247
      %p249 = pneg %p248
      // Predicated region
      $region9: #{tpu_custom_call.1} parent=5 // pred_check
        _
      $region10: #{tpu_custom_call.1} parent=5 // pred_check_branch
        %251 = sbr.rel (%p248) target = $region12
      $region11: #{tpu_custom_call.1} parent=5 // pred_region
        %s252 = ssub.s32 %s18, 1
        // Predicated region
        $region13: #{tpu_custom_call.1} parent=11 // pred_check
          %p253 = pneg %p65
        $region14: #{tpu_custom_call.1} parent=11 // pred_check_branch
          %255 = sbr.rel (%p253) target = $region16
        $region15: #{tpu_custom_call.1} parent=11 // pred_region
          _
        $region16: #{tpu_custom_call.1} parent=11 // pred_fallthru
          _
        // Predicated region
        $region17: #{tpu_custom_call.1} parent=11 // pred_check
          %p256 = pneg %p86
        $region18: #{tpu_custom_call.1} parent=11 // pred_check_branch
          %258 = sbr.rel (%p256) target = $region20
        $region19: #{tpu_custom_call.1} parent=11 // pred_region
          _
        $region20: #{tpu_custom_call.1} parent=11 // pred_fallthru
          _
        // Predicated region
        $region21: #{tpu_custom_call.1} parent=11 // pred_check
          %p259 = pneg %p107
        $region22: #{tpu_custom_call.1} parent=11 // pred_check_branch
          %261 = sbr.rel (%p259) target = $region24
        $region23: #{tpu_custom_call.1} parent=11 // pred_region
          _
        $region24: #{tpu_custom_call.1} parent=11 // pred_fallthru
          _
        // Predicated region
        $region25: #{tpu_custom_call.1} parent=11 // pred_check
          %p262 = pneg %p128
        $region26: #{tpu_custom_call.1} parent=11 // pred_check_branch
          %264 = sbr.rel (%p262) target = $region28
        $region27: #{tpu_custom_call.1} parent=11 // pred_region
          _
        $region28: #{tpu_custom_call.1} parent=11 // pred_fallthru
          _
        // Predicated region
        $region29: #{tpu_custom_call.1} parent=11 // pred_check
          %p265 = pneg %p149
        $region30: #{tpu_custom_call.1} parent=11 // pred_check_branch
          %267 = sbr.rel (%p265) target = $region32
        $region31: #{tpu_custom_call.1} parent=11 // pred_region
          _
        $region32: #{tpu_custom_call.1} parent=11 // pred_fallthru
          _
        // Predicated region
        $region33: #{tpu_custom_call.1} parent=11 // pred_check
          %p268 = pneg %p170
        $region34: #{tpu_custom_call.1} parent=11 // pred_check_branch
          %270 = sbr.rel (%p268) target = $region36
        $region35: #{tpu_custom_call.1} parent=11 // pred_region
          _
        $region36: #{tpu_custom_call.1} parent=11 // pred_fallthru
          _
        // Predicated region
        $region37: #{tpu_custom_call.1} parent=11 // pred_check
          %p271 = pneg %p191
        $region38: #{tpu_custom_call.1} parent=11 // pred_check_branch
          %273 = sbr.rel (%p271) target = $region40
        $region39: #{tpu_custom_call.1} parent=11 // pred_region
          _
        $region40: #{tpu_custom_call.1} parent=11 // pred_fallthru
          _
        // Predicated region
        $region41: #{tpu_custom_call.1} parent=11 // pred_check
          %p274 = pneg %p212
        $region42: #{tpu_custom_call.1} parent=11 // pred_check_branch
          %276 = sbr.rel (%p274) target = $region44
        $region43: #{tpu_custom_call.1} parent=11 // pred_region
          _
        $region44: #{tpu_custom_call.1} parent=11 // pred_fallthru
          _
      $region12: #{tpu_custom_call.1} parent=5 // pred_fallthru
        _
      %p277 = scmp.lt.s32.totalorder %s18, 2
      // Predicated region
      $region45: #{tpu_custom_call.1} parent=5 // pred_check
        %p278 = pneg %p277
      $region46: #{tpu_custom_call.1} parent=5 // pred_check_branch
        %280 = sbr.rel (%p278) target = $region48
      $region47: #{tpu_custom_call.1} parent=5 // pred_region
        // Predicated region
        $region49: #{tpu_custom_call.1} parent=47 // pred_check
          %p281 = pneg %p38
        $region50: #{tpu_custom_call.1} parent=47 // pred_check_branch
          %283 = sbr.rel (%p281) target = $region52
        $region51: #{tpu_custom_call.1} parent=47 // pred_region
          %s284 = sand.u32 %s28, 1
          %s285 = scalar_lea.sflag [#allocation3], %s284
          %s286 = sand.u32 %s28, 1
          %s287 = smul.addr %s286, 8
          %s288 = scalar_lea.vmem [#allocation2], %s287
          %s290 = ssub.s32 128, 128
          %291 = vsyncadd %s285, %s290
          %s292 = smul.addr %s18, 128
          %s293 = scalar_lea.hbm %s0, %s292
          %s295 = sshll.u32 %s288, 4
          %s296 = int_to_ptr.vmem [resolvable:$true] %s295
          %298 = dma.hbm_to_vmem [thread:$0]  %s293, 128, %s296, %s285
        $region52: #{tpu_custom_call.1} parent=47 // pred_fallthru
          _
      $region48: #{tpu_custom_call.1} parent=5 // pred_fallthru
        _
      %p299 = scmp.le.s32.totalorder 1, %s18
      %p300 = scmp.lt.s32.totalorder %s18, 3
      %p301 = pnand %p299, %p300
      %p302 = pneg %p301
      // Predicated region
      $region53: #{tpu_custom_call.1} parent=5 // pred_check
        _
      $region54: #{tpu_custom_call.1} parent=5 // pred_check_branch
        %304 = sbr.rel (%p301) target = $region56
      $region55: #{tpu_custom_call.1} parent=5 // pred_region
        %s305 = ssub.s32 %s18, 1
        %s306 = sand.u32 %s31, 1
        %s307 = scalar_lea.sflag [#allocation3], %s306
        %s308 = sand.u32 %s31, 1
        %s309 = smul.addr %s308, 8
        %s310 = scalar_lea.vmem [#allocation2], %s309
        // Predicated region
        $region57: #{tpu_custom_call.1} parent=55 // pred_check
          %p311 = pneg %p44
        $region58: #{tpu_custom_call.1} parent=55 // pred_check_branch
          %313 = sbr.rel (%p311) target = $region60
        $region59: #{tpu_custom_call.1} parent=55 // pred_region
          %314 = dma.done %s307, 128
        $region60: #{tpu_custom_call.1} parent=55 // pred_fallthru
          _
        %s315 = sand.u32 %s31, 1
        %s316 = scalar_lea.sflag [#allocation3], %s315
        %s317 = sand.u32 %s31, 1
        %s318 = smul.addr %s317, 8
        %s319 = scalar_lea.vmem [#allocation2], %s318
        %p320 = pneg %p44
        %p321 = pneg %p41
        %p322 = pneg %p65
        %p323 = pneg %p62
        %p324 = pneg %p86
        %p325 = pneg %p83
        %p326 = pneg %p107
        %p327 = pneg %p104
        %p328 = pneg %p128
        %p329 = pneg %p125
        %p330 = pneg %p149
        %p331 = pneg %p146
        %p332 = pneg %p170
        %p333 = pneg %p167
        %p334 = pneg %p191
        %p335 = pneg %p188
        %p336 = pneg %p212
        %p337 = pneg %p209
        %p338 = pneg %p238
        %p339 = pneg %p235
        %p340 = scmp.lt.s32.totalorder %s23, 1
        %s341 = scalar_select %p340, %s23, 1
        %s342 = smul.addr %s341, 8
        %s343 = scalar_lea.vmem %s9, %s342
        %p344 = scmp.lt.s32.totalorder %s23, 1
        %s345 = scalar_select %p344, %s23, 1
        %s346 = smul.addr %s345, 8
        %s347 = scalar_lea.vmem %s9, %s346
        %v348 = vld [vmem:[%s310] sm:$0xff]
        %v349 = vld [vmem:[%s1] sm:$0xff]
        %v350 = vld [vmem:[%s1 + $0x8] sm:$0xff]
        %v351 = vld [vmem:[%s1 + $0x10] sm:$0xff]
        %v352 = vld [vmem:[%s1 + $0x18] sm:$0xff]
        %v353 = vld [vmem:[%s2] sm:$0x1]
        %v355 = vlaneseq
        %v356 = vshrl.u32 %v355, 7
        %v357 = vsub.s32 0, %v356
        %v358 = vrot.slane %v353, %v357
        %vm360 = vcmask 261120
        %v362 = vsel %vm360, %v348, 0
        %364 = vmatprep.subr.mxu0 0.0
        %365 = vmatpush1.msra.mxu0 %v349
        %366 = vmatprep.subr.mxu0 0.0
        %367 = vmatpush1.msra.mxu0 %v350
        %368 = vmatprep.subr.mxu0 0.0
        %369 = vmatpush1.msra.mxu0 %v351
        %370 = vmatprep.subr.mxu0 0.0
        %371 = vmatpush1.msra.mxu0 %v352
        %372 = vmatprep.subr.mxu0 0.0
        %373 = vmatpush1.msra.mxu0 0.0
        %374 = vmatprep.subr.mxu0 0.0
        %375 = vmatpush1.msra.mxu0 0.0
        %376 = vmatprep.subr.mxu0 0.0
        %377 = vmatpush1.msra.mxu0 0.0
        %378 = vmatprep.subr.mxu0 0.0
        %379 = vmatpush1.msra.mxu0 0.0
        %380 = vmatprep.subr.mxu0 0.0
        %381 = vmatpush1.msra.mxu0 0.0
        %382 = vmatprep.subr.mxu0 0.0
        %383 = vmatpush1.msra.mxu0 0.0
        %384 = vmatprep.subr.mxu0 0.0
        %385 = vmatpush1.msra.mxu0 0.0
        %386 = vmatprep.subr.mxu0 0.0
        %387 = vmatpush1.msra.mxu0 0.0
        %388 = vmatprep.subr.mxu0 0.0
        %389 = vmatpush1.msra.mxu0 0.0
        %390 = vmatprep.subr.mxu0 0.0
        %391 = vmatpush1.msra.mxu0 0.0
        %392 = vmatprep.subr.mxu0 0.0
        %393 = vmatpush1.msra.mxu0 0.0
        %394 = vmatprep.subr.mxu0 0.0
        %395 = vmatpush1.msra.mxu0 0.0
        %396 = vmatprep.subr.mxu0 0.0
        %397 = vmatpush1.msra.mxu0 0.0
        %398 = vmatprep.subr.mxu0 0.0
        %399 = vmatpush1.msra.mxu0 0.0
        %400 = vmatprep.subr.mxu0 0.0
        %401 = vmatpush1.msra.mxu0 0.0
        %402 = vmatprep.subr.mxu0 0.0
        %403 = vmatpush1.msra.mxu0 0.0
        %404 = vmatprep.subr.mxu0 0.0
        %405 = vmatpush1.msra.mxu0 0.0
        %406 = vmatprep.subr.mxu0 0.0
        %407 = vmatpush1.msra.mxu0 0.0
        %408 = vmatprep.subr.mxu0 0.0
        %409 = vmatpush1.msra.mxu0 0.0
        %410 = vmatprep.subr.mxu0 0.0
        %411 = vmatpush1.msra.mxu0 0.0
        %412 = vmatprep.subr.mxu0 0.0
        %413 = vmatpush1.msra.mxu0 0.0
        %414 = vmatprep.subr.mxu0 0.0
        %415 = vmatpush1.msra.mxu0 0.0
        %416 = vmatprep.subr.mxu0 0.0
        %417 = vmatpush1.msra.mxu0 0.0
        %418 = vmatprep.subr.mxu0 0.0
        %419 = vmatpush1.msra.mxu0 0.0
        %420 = vmatprep.subr.mxu0 0.0
        %421 = vmatpush1.msra.mxu0 0.0
        %422 = vmatprep.subr.mxu0 0.0
        %423 = vmatpush1.msra.mxu0 0.0
        %424 = vmatprep.subr.mxu0 0.0
        %425 = vmatpush1.msra.mxu0 0.0
        %426 = vmatprep.subr.mxu0 0.0
        %427 = vmatpush1.msra.mxu0 0.0
        %428 = vmatprep.mubr.f32.mxu0 0.0
        %429 = vmatmul.mubr.f32.gmra.mrb[0].mxu0 %v362
        %v430 = vpop.f32.mrb[0].mxu0
        %v431 = vadd.f32 %v358, %v430
        %v432 = vpop.f32.mrb[0].mxu0
        %433 = vdwg.mxu0
        %v434 = vmax.f32 %v431, 0.0
        %v435 = vld [vmem:[%s3] sm:$0xff]
        %v436 = vld [vmem:[%s3 + $0x8] sm:$0xff]
        %v437 = vld [vmem:[%s3 + $0x10] sm:$0xf]
        %v438 = vld [vmem:[%s4] sm:$0x1]
        %v440 = vlaneseq
        %v441 = vshrl.u32 %v440, 7
        %v442 = vsub.s32 0, %v441
        %v443 = vrot.slane %v438, %v442
        %vm445 = vcmask 162816
        %v447 = vsel %vm445, %v434, 0
        %vm449 = vcmask 1043456
        %v451 = vsel %vm449, %v437, 0
        %453 = vmatprep.subr.mxu0 0.0
        %454 = vmatpush1.msra.mxu0 %v435
        %455 = vmatprep.subr.mxu0 0.0
        %456 = vmatpush1.msra.mxu0 %v436
        %457 = vmatprep.subr.mxu0 0.0
        %458 = vmatpush1.msra.mxu0 %v451
        %459 = vmatprep.subr.mxu0 0.0
        %460 = vmatpush1.msra.mxu0 0.0
        %461 = vmatprep.subr.mxu0 0.0
        %462 = vmatpush1.msra.mxu0 0.0
        %463 = vmatprep.subr.mxu0 0.0
        %464 = vmatpush1.msra.mxu0 0.0
        %465 = vmatprep.subr.mxu0 0.0
        %466 = vmatpush1.msra.mxu0 0.0
        %467 = vmatprep.subr.mxu0 0.0
        %468 = vmatpush1.msra.mxu0 0.0
        %469 = vmatprep.subr.mxu0 0.0
        %470 = vmatpush1.msra.mxu0 0.0
        %471 = vmatprep.subr.mxu0 0.0
        %472 = vmatpush1.msra.mxu0 0.0
        %473 = vmatprep.subr.mxu0 0.0
        %474 = vmatpush1.msra.mxu0 0.0
        %475 = vmatprep.subr.mxu0 0.0
        %476 = vmatpush1.msra.mxu0 0.0
        %477 = vmatprep.subr.mxu0 0.0
        %478 = vmatpush1.msra.mxu0 0.0
        %479 = vmatprep.subr.mxu0 0.0
        %480 = vmatpush1.msra.mxu0 0.0
        %481 = vmatprep.subr.mxu0 0.0
        %482 = vmatpush1.msra.mxu0 0.0
        %483 = vmatprep.subr.mxu0 0.0
        %484 = vmatpush1.msra.mxu0 0.0
        %485 = vmatprep.subr.mxu0 0.0
        %486 = vmatpush1.msra.mxu0 0.0
        %487 = vmatprep.subr.mxu0 0.0
        %488 = vmatpush1.msra.mxu0 0.0
        %489 = vmatprep.subr.mxu0 0.0
        %490 = vmatpush1.msra.mxu0 0.0
        %491 = vmatprep.subr.mxu0 0.0
        %492 = vmatpush1.msra.mxu0 0.0
        %493 = vmatprep.subr.mxu0 0.0
        %494 = vmatpush1.msra.mxu0 0.0
        %495 = vmatprep.subr.mxu0 0.0
        %496 = vmatpush1.msra.mxu0 0.0
        %497 = vmatprep.subr.mxu0 0.0
        %498 = vmatpush1.msra.mxu0 0.0
        %499 = vmatprep.subr.mxu0 0.0
        %500 = vmatpush1.msra.mxu0 0.0
        %501 = vmatprep.subr.mxu0 0.0
        %502 = vmatpush1.msra.mxu0 0.0
        %503 = vmatprep.subr.mxu0 0.0
        %504 = vmatpush1.msra.mxu0 0.0
        %505 = vmatprep.subr.mxu0 0.0
        %506 = vmatpush1.msra.mxu0 0.0
        %507 = vmatprep.subr.mxu0 0.0
        %508 = vmatpush1.msra.mxu0 0.0
        %509 = vmatprep.subr.mxu0 0.0
        %510 = vmatpush1.msra.mxu0 0.0
        %511 = vmatprep.subr.mxu0 0.0
        %512 = vmatpush1.msra.mxu0 0.0
        %513 = vmatprep.subr.mxu0 0.0
        %514 = vmatpush1.msra.mxu0 0.0
        %515 = vmatprep.subr.mxu0 0.0
        %516 = vmatpush1.msra.mxu0 0.0
        %517 = vmatprep.mubr.f32.mxu0 0.0
        %518 = vmatmul.mubr.f32.gmra.mrb[0].mxu0 %v447
        %v519 = vpop.f32.mrb[0].mxu0
        %v520 = vadd.f32 %v443, %v519
        %v521 = vpop.f32.mrb[0].mxu0
        %522 = vdwg.mxu0
        %v523 = vmax.f32 %v520, 0.0
        %v524 = vld [vmem:[%s5] sm:$0xff]
        %v525 = vld [vmem:[%s5 + $0x8] sm:$0xff]
        %v526 = vld [vmem:[%s5 + $0x10] sm:$0xf]
        %v527 = vld [vmem:[%s6] sm:$0x1]
        %v529 = vlaneseq
        %v530 = vshrl.u32 %v529, 7
        %v531 = vsub.s32 0, %v530
        %v532 = vrot.slane %v527, %v531
        %v535 = vsel %vm445, %v523, 0
        %v538 = vsel %vm449, %v526, 0
        %540 = vmatprep.subr.mxu0 0.0
        %541 = vmatpush1.msra.mxu0 %v524
        %542 = vmatprep.subr.mxu0 0.0
        %543 = vmatpush1.msra.mxu0 %v525
        %544 = vmatprep.subr.mxu0 0.0
        %545 = vmatpush1.msra.mxu0 %v538
        %546 = vmatprep.subr.mxu0 0.0
        %547 = vmatpush1.msra.mxu0 0.0
        %548 = vmatprep.subr.mxu0 0.0
        %549 = vmatpush1.msra.mxu0 0.0
        %550 = vmatprep.subr.mxu0 0.0
        %551 = vmatpush1.msra.mxu0 0.0
        %552 = vmatprep.subr.mxu0 0.0
        %553 = vmatpush1.msra.mxu0 0.0
        %554 = vmatprep.subr.mxu0 0.0
        %555 = vmatpush1.msra.mxu0 0.0
        %556 = vmatprep.subr.mxu0 0.0
        %557 = vmatpush1.msra.mxu0 0.0
        %558 = vmatprep.subr.mxu0 0.0
        %559 = vmatpush1.msra.mxu0 0.0
        %560 = vmatprep.subr.mxu0 0.0
        %561 = vmatpush1.msra.mxu0 0.0
        %562 = vmatprep.subr.mxu0 0.0
        %563 = vmatpush1.msra.mxu0 0.0
        %564 = vmatprep.subr.mxu0 0.0
        %565 = vmatpush1.msra.mxu0 0.0
        %566 = vmatprep.subr.mxu0 0.0
        %567 = vmatpush1.msra.mxu0 0.0
        %568 = vmatprep.subr.mxu0 0.0
        %569 = vmatpush1.msra.mxu0 0.0
        %570 = vmatprep.subr.mxu0 0.0
        %571 = vmatpush1.msra.mxu0 0.0
        %572 = vmatprep.subr.mxu0 0.0
        %573 = vmatpush1.msra.mxu0 0.0
        %574 = vmatprep.subr.mxu0 0.0
        %575 = vmatpush1.msra.mxu0 0.0
        %576 = vmatprep.subr.mxu0 0.0
        %577 = vmatpush1.msra.mxu0 0.0
        %578 = vmatprep.subr.mxu0 0.0
        %579 = vmatpush1.msra.mxu0 0.0
        %580 = vmatprep.subr.mxu0 0.0
        %581 = vmatpush1.msra.mxu0 0.0
        %582 = vmatprep.subr.mxu0 0.0
        %583 = vmatpush1.msra.mxu0 0.0
        %584 = vmatprep.subr.mxu0 0.0
        %585 = vmatpush1.msra.mxu0 0.0
        %586 = vmatprep.subr.mxu0 0.0
        %587 = vmatpush1.msra.mxu0 0.0
        %588 = vmatprep.subr.mxu0 0.0
        %589 = vmatpush1.msra.mxu0 0.0
        %590 = vmatprep.subr.mxu0 0.0
        %591 = vmatpush1.msra.mxu0 0.0
        %592 = vmatprep.subr.mxu0 0.0
        %593 = vmatpush1.msra.mxu0 0.0
        %594 = vmatprep.subr.mxu0 0.0
        %595 = vmatpush1.msra.mxu0 0.0
        %596 = vmatprep.subr.mxu0 0.0
        %597 = vmatpush1.msra.mxu0 0.0
        %598 = vmatprep.subr.mxu0 0.0
        %599 = vmatpush1.msra.mxu0 0.0
        %600 = vmatprep.subr.mxu0 0.0
        %601 = vmatpush1.msra.mxu0 0.0
        %602 = vmatprep.subr.mxu0 0.0
        %603 = vmatpush1.msra.mxu0 0.0
        %604 = vmatprep.mubr.f32.mxu0 0.0
        %605 = vmatmul.mubr.f32.gmra.mrb[0].mxu0 %v535
        %v606 = vpop.f32.mrb[0].mxu0
        %v607 = vadd.f32 %v532, %v606
        %v608 = vpop.f32.mrb[0].mxu0
        %609 = vdwg.mxu0
        %v610 = vmax.f32 %v607, 0.0
        %v611 = vld [vmem:[%s7] sm:$0xff]
        %v612 = vld [vmem:[%s7 + $0x8] sm:$0xff]
        %v613 = vld [vmem:[%s7 + $0x10] sm:$0xf]
        %v614 = vld [vmem:[%s8] sm:$0x1]
        %v616 = vlaneseq
        %v617 = vshrl.u32 %v616, 7
        %v618 = vsub.s32 0, %v617
        %v619 = vrot.slane %v614, %v618
        %v622 = vsel %vm445, %v610, 0
        %v625 = vsel %vm449, %v613, 0
        %627 = vmatprep.subr.mxu0 0.0
        %628 = vmatpush1.msra.mxu0 %v611
        %629 = vmatprep.subr.mxu0 0.0
        %630 = vmatpush1.msra.mxu0 %v612
        %631 = vmatprep.subr.mxu0 0.0
        %632 = vmatpush1.msra.mxu0 %v625
        %633 = vmatprep.subr.mxu0 0.0
        %634 = vmatpush1.msra.mxu0 0.0
        %635 = vmatprep.subr.mxu0 0.0
        %636 = vmatpush1.msra.mxu0 0.0
        %637 = vmatprep.subr.mxu0 0.0
        %638 = vmatpush1.msra.mxu0 0.0
        %639 = vmatprep.subr.mxu0 0.0
        %640 = vmatpush1.msra.mxu0 0.0
        %641 = vmatprep.subr.mxu0 0.0
        %642 = vmatpush1.msra.mxu0 0.0
        %643 = vmatprep.subr.mxu0 0.0
        %644 = vmatpush1.msra.mxu0 0.0
        %645 = vmatprep.subr.mxu0 0.0
        %646 = vmatpush1.msra.mxu0 0.0
        %647 = vmatprep.subr.mxu0 0.0
        %648 = vmatpush1.msra.mxu0 0.0
        %649 = vmatprep.subr.mxu0 0.0
        %650 = vmatpush1.msra.mxu0 0.0
        %651 = vmatprep.subr.mxu0 0.0
        %652 = vmatpush1.msra.mxu0 0.0
        %653 = vmatprep.subr.mxu0 0.0
        %654 = vmatpush1.msra.mxu0 0.0
        %655 = vmatprep.subr.mxu0 0.0
        %656 = vmatpush1.msra.mxu0 0.0
        %657 = vmatprep.subr.mxu0 0.0
        %658 = vmatpush1.msra.mxu0 0.0
        %659 = vmatprep.subr.mxu0 0.0
        %660 = vmatpush1.msra.mxu0 0.0
        %661 = vmatprep.subr.mxu0 0.0
        %662 = vmatpush1.msra.mxu0 0.0
        %663 = vmatprep.subr.mxu0 0.0
        %664 = vmatpush1.msra.mxu0 0.0
        %665 = vmatprep.subr.mxu0 0.0
        %666 = vmatpush1.msra.mxu0 0.0
        %667 = vmatprep.subr.mxu0 0.0
        %668 = vmatpush1.msra.mxu0 0.0
        %669 = vmatprep.subr.mxu0 0.0
        %670 = vmatpush1.msra.mxu0 0.0
        %671 = vmatprep.subr.mxu0 0.0
        %672 = vmatpush1.msra.mxu0 0.0
        %673 = vmatprep.subr.mxu0 0.0
        %674 = vmatpush1.msra.mxu0 0.0
        %675 = vmatprep.subr.mxu0 0.0
        %676 = vmatpush1.msra.mxu0 0.0
        %677 = vmatprep.subr.mxu0 0.0
        %678 = vmatpush1.msra.mxu0 0.0
        %679 = vmatprep.subr.mxu0 0.0
        %680 = vmatpush1.msra.mxu0 0.0
        %681 = vmatprep.subr.mxu0 0.0
        %682 = vmatpush1.msra.mxu0 0.0
        %683 = vmatprep.subr.mxu0 0.0
        %684 = vmatpush1.msra.mxu0 0.0
        %685 = vmatprep.subr.mxu0 0.0
        %686 = vmatpush1.msra.mxu0 0.0
        %687 = vmatprep.subr.mxu0 0.0
        %688 = vmatpush1.msra.mxu0 0.0
        %689 = vmatprep.subr.mxu0 0.0
        %690 = vmatpush1.msra.mxu0 0.0
        %691 = vmatprep.mubr.f32.mxu0 0.0
        %692 = vmatmul.mubr.f32.gmra.mrb[0].mxu0 %v622
        %v693 = vpop.f32.mrb[0].mxu0
        %v694 = vadd.f32 %v619, %v693
        %v695 = vpop.f32.mrb[0].mxu0
        %696 = vdwg.mxu0
        %vm697 = vcmask 31744
        %698 = vst.msk [vmem:[%s347] sm:$0xff] %vm697, %v694
        %p699 = scmp.lt.s32.totalorder %s23, 1
        %s700 = scalar_select %p699, %s23, 1
        %s701 = smul.addr %s700, 8
        %s702 = scalar_lea.vmem %s9, %s701
        // Predicated region
        $region61: #{tpu_custom_call.1} parent=55 // pred_check
          %p703 = pneg %p235
        $region62: #{tpu_custom_call.1} parent=55 // pred_check_branch
          %705 = sbr.rel (%p703) target = $region64
        $region63: #{tpu_custom_call.1} parent=55 // pred_region
          _
        $region64: #{tpu_custom_call.1} parent=55 // pred_fallthru
          _
      $region56: #{tpu_custom_call.1} parent=5 // pred_fallthru
        _
      %p706 = scmp.le.s32.totalorder 2, %s18
      // Predicated region
      $region65: #{tpu_custom_call.1} parent=5 // pred_check
        %p707 = pneg %p706
      $region66: #{tpu_custom_call.1} parent=5 // pred_check_branch
        %709 = sbr.rel (%p707) target = $region68
      $region67: #{tpu_custom_call.1} parent=5 // pred_region
        %s710 = ssub.s32 %s18, 2
        // Predicated region
        $region69: #{tpu_custom_call.1} parent=67 // pred_check
          %p711 = pneg %p241
        $region70: #{tpu_custom_call.1} parent=67 // pred_check_branch
          %713 = sbr.rel (%p711) target = $region72
        $region71: #{tpu_custom_call.1} parent=67 // pred_region
          %p714 = scmp.lt.s32.totalorder %s24, 1
          %s715 = scalar_select %p714, %s24, 1
          %s716 = smul.addr %s715, 8
          %s717 = scalar_lea.vmem %s9, %s716
        $region72: #{tpu_custom_call.1} parent=67 // pred_fallthru
          _
      $region68: #{tpu_custom_call.1} parent=5 // pred_fallthru
        _
    $region6: #{tpu_custom_call.1} parent=1 // loop_footer
      %s22 = sadd.s32 1, %s18
    $region7: #{tpu_custom_call.1} parent=1 // loop_footer_branch
      %17 = sbr.rel target = $region3
    $region8: #{tpu_custom_call.1} parent=1 // loop_exit
      _
    %718 = vsyncpa [#allocation3], 1
    %s719 = scalar_lea.sflag [#allocation3], 1
    %720 = vsyncpa %s719, 1

</llo_original>
